<compile_context>
chip_gen: v7x
topology: tpu7x:2x2x1
jax: 0.10.0
libtpu: 0.0.40
codegen_flags: <defaults>
</compile_context>

<pallas_src>
import functools
from math import sqrt

import jax
import jax.numpy as jnp
from jax import lax
from jax.experimental import pallas as pl
from jax.experimental.pallas import tpu as pltpu


# --------------------------------------------------------------------------- #
# Kernel
# --------------------------------------------------------------------------- #
def _flash_sf_kernel(q_ref, k_ref, v_ref, w_ref, o_ref, m_ref, l_ref, acc_ref):
    """One (batch*head, q-tile, kv-tile) step of SF attention with online softmax.

    q_ref: (1, tq, E)   k_ref: (1, tk, E)   v_ref: (1, tk, D)
    w_ref: (tq, tk)     o_ref: (1, tq, D)
    scratch: m_ref (tq,1), l_ref (tq,1), acc_ref (tq,D)  -- all f32
    """
    j = pl.program_id(2)

    @pl.when(j == 0)
    def _init():
        m_ref[...] = jnp.full_like(m_ref, -jnp.inf)
        l_ref[...] = jnp.zeros_like(l_ref)
        acc_ref[...] = jnp.zeros_like(acc_ref)

    q = q_ref[0]          # (tq, E)
    k = k_ref[0]          # (tk, E)
    v = v_ref[0]          # (tk, D)
    w = w_ref[...]        # (tq, tk), already contains the 1/sqrt(E) scale

    # scores = q @ k^T without materializing a transpose: contract last dims.
    s = lax.dot_general(
        q, k,
        dimension_numbers=(((1,), (1,)), ((), ())),
        preferred_element_type=jnp.float32,
    )                                             # (tq, tk), f32
    a = s * w                                     # SF weighting (scale folded in)

    # Online (flash) softmax update.
    m_prev = m_ref[...]
    m_new = jnp.maximum(m_prev, jnp.max(a, axis=-1, keepdims=True))
    alpha = jnp.exp(m_prev - m_new)
    p = jnp.exp(a - m_new)

    l_ref[...] = alpha * l_ref[...] + jnp.sum(p, axis=-1, keepdims=True)
    acc_ref[...] = alpha * acc_ref[...] + jnp.dot(
        p.astype(v.dtype), v, preferred_element_type=jnp.float32)
    m_ref[...] = m_new

    @pl.when(j == pl.num_programs(2) - 1)
    def _finalize():
        out = acc_ref[...] * pl.reciprocal(l_ref[...], approx=True)
        o_ref[0] = out.astype(o_ref.dtype)


# --------------------------------------------------------------------------- #
# Wrapper
# --------------------------------------------------------------------------- #
def _pick_tile(n, target, align):
    """Largest t <= target with t % align == 0 and n % t == 0; else full dim n."""
    if n <= target:
        return n
    t = (target // align) * align
    while t >= align:
        if n % t == 0:
            return t
        t -= align
    return n


def full_attention_sf(queries, keys, values, weight_mat, scale=None,
                      *, q_tile=256, kv_tile=512, interpret=False):
    """queries: (B,L,H,E), keys: (B,S,H,E), values: (B,S,H,D),
    weight_mat: (1,1,L,S).  Returns (V: (B,L,H,D), None)  [output_attention=False]."""
    B, L, H, E = queries.shape
    _, S, _, D = values.shape
    if scale is None:
        scale = 1.0 / sqrt(E)

    # TODO(synk): these relayouts to (B*H, L, E) are full-tensor XLA transposes; fusing
    # the layout into the producing projections upstream would remove the extra HBM pass.
    q = jnp.transpose(queries, (0, 2, 1, 3)).reshape(B * H, L, E)
    k = jnp.transpose(keys, (0, 2, 1, 3)).reshape(B * H, S, E)
    v = jnp.transpose(values, (0, 2, 1, 3)).reshape(B * H, S, D)

    # Fold the scalar scale into the shared SF weight matrix once (shared over B*H).
    w = (weight_mat.reshape(L, S).astype(jnp.float32)
         * jnp.asarray(scale, jnp.float32))

    tq = _pick_tile(L, q_tile, 8)      # sublane-aligned query tile
    tk = _pick_tile(S, kv_tile, 128)   # lane-aligned key tile (last dim of the w tile)
    grid = (B * H, L // tq, S // tk)

    out = pl.pallas_call(
        _flash_sf_kernel,
        out_shape=jax.ShapeDtypeStruct((B * H, L, D), queries.dtype),
        grid_spec=pltpu.PrefetchScalarGridSpec(
            num_scalar_prefetch=0,
            grid=grid,
            in_specs=[
                pl.BlockSpec((1, tq, E), lambda g, i, j: (g, i, 0)),   # Q
                pl.BlockSpec((1, tk, E), lambda g, i, j: (g, j, 0)),   # K
                pl.BlockSpec((1, tk, D), lambda g, i, j: (g, j, 0)),   # V
                pl.BlockSpec((tq, tk), lambda g, i, j: (i, j)),        # scaled weight_mat
            ],
            out_specs=pl.BlockSpec((1, tq, D), lambda g, i, j: (g, i, 0)),
            scratch_shapes=[
                pltpu.VMEM((tq, 1), jnp.float32),   # running max m
                pltpu.VMEM((tq, 1), jnp.float32),   # running denom l
                pltpu.VMEM((tq, D), jnp.float32),   # output accumulator
            ],
        ),
        compiler_params=pltpu.CompilerParams(
            dimension_semantics=("parallel", "parallel", "arbitrary"),
            vmem_limit_bytes=32 * 1024 * 1024,
        ),
        interpret=interpret,
    )(q, k, v, w)

    out = out.reshape(B, H, L, D)
    return jnp.transpose(out, (0, 2, 1, 3)), None


# --------------------------------------------------------------------------- #
# Parameter setup (plain-JAX glue) — matches the module's deterministic init:
#   attn_tau = ones(N,1)*ij_attn_adjust_init, exp_para = -10.0, tau = ones(1,1,N,1)
# --------------------------------------------------------------------------- #
def make_sf_weight_mat(token_num, ij_attn_adjust_init=10.0):
    attn_tau = jnp.ones((token_num, 1), jnp.float32) * ij_attn_adjust_init
    exp_para = jnp.asarray(-10.0, jnp.float32)
    tau = jnp.ones((1, 1, token_num, 1), jnp.float32)

    r = jnp.arange(token_num)
    ij_mat = jnp.abs(r[:, None] - r[None, :]).astype(jnp.float32)

    ij_pow = jnp.power(ij_mat, jax.nn.softplus(exp_para))     # |i-j|^softplus(exp_para)
    wm = -ij_pow / jax.nn.softplus(attn_tau)                  # (N, N)
    wm = wm[None, None, :, :]                                 # (1, 1, N, N)
    wm = jax.nn.softmax(wm / jax.nn.softplus(tau), axis=-1)   # softmax over last dim
    return wm


def _reference_jax(queries, keys, values, weight_mat, scale):
    scores = jnp.einsum('blhe,bshe->bhls', queries, keys)
    a = jax.nn.softmax(scale * scores * weight_mat, axis=-1)
    return jnp.einsum('bhls,bshd->blhd', a, values)


if __name__ == "__main__":
    key = jax.random.PRNGKey(0)

    # ---- Test 1: small shapes consistent with the forward (single-tile path) ----
    B, L, S, H, E, D = 2, 8, 8, 2, 32, 32
    kq, kk, kv = jax.random.split(key, 3)
    queries = jax.random.normal(kq, (B, L, H, E), jnp.float32)
    keys = jax.random.normal(kk, (B, S, H, E), jnp.float32)
    values = jax.random.normal(kv, (B, S, H, D), jnp.float32)
    weight_mat = make_sf_weight_mat(token_num=L)              # (1, 1, L, S)
    scale = 1.0 / sqrt(E)

    out, attn = full_attention_sf(queries, keys, values, weight_mat, scale)
    out = jax.block_until_ready(out)
    ref = _reference_jax(queries, keys, values, weight_mat, scale)
    assert out.shape == (B, L, H, D)
    assert attn is None
    assert jnp.allclose(out, ref, atol=2e-3, rtol=2e-3), "test 1 mismatch"

    # ---- Test 2: exercises the multi-tile online-softmax path (nL=4, nS=2) ----
    B2, L2, S2, H2, E2, D2 = 2, 256, 256, 2, 32, 32
    kq2, kk2, kv2 = jax.random.split(jax.random.PRNGKey(1), 3)
    q2 = jax.random.normal(kq2, (B2, L2, H2, E2), jnp.float32)
    k2 = jax.random.normal(kk2, (B2, S2, H2, E2), jnp.float32)
    v2 = jax.random.normal(kv2, (B2, S2, H2, D2), jnp.float32)
    wm2 = make_sf_weight_mat(token_num=L2)
    sc2 = 1.0 / sqrt(E2)

    out2, _ = full_attention_sf(q2, k2, v2, wm2, sc2, q_tile=64, kv_tile=128)
    out2 = jax.block_until_ready(out2)
    ref2 = _reference_jax(q2, k2, v2, wm2, sc2)
    assert out2.shape == (B2, L2, H2, D2)
    assert jnp.allclose(out2, ref2, atol=2e-3, rtol=2e-3), "test 2 mismatch"

    print("KERNEL_OK")
</pallas_src>

<mosaic_0001>
module attributes {stable_mosaic.version = 11 : i64} {
  func.func @_flash_sf_kernel(%arg0: i32, %arg1: i32, %arg2: i32, %arg3: memref<1x8x32xf32, #tpu.memory_space<vmem>>, %arg4: memref<1x8x32xf32, #tpu.memory_space<vmem>>, %arg5: memref<1x8x32xf32, #tpu.memory_space<vmem>>, %arg6: memref<8x8xf32, #tpu.memory_space<vmem>>, %arg7: memref<1x8x32xf32, #tpu.memory_space<vmem>>, %arg8: memref<8x1xf32, #tpu.memory_space<vmem>>, %arg9: memref<8x1xf32, #tpu.memory_space<vmem>>, %arg10: memref<8x32xf32, #tpu.memory_space<vmem>>) attributes {dimension_semantics = [#tpu.dimension_semantics<parallel>, #tpu.dimension_semantics<parallel>, #tpu.dimension_semantics<arbitrary>], iteration_bounds = array<i64: 4, 1, 1>, scalar_prefetch = 0 : i64, scratch_operands = 3 : i64, tpu.core_type = #tpu.core_type<tc>, window_params = [{transform_indices = @transform_0, window_bounds = array<i64: 1, 8, 32>}, {transform_indices = @transform_1, window_bounds = array<i64: 1, 8, 32>}, {transform_indices = @transform_2, window_bounds = array<i64: 1, 8, 32>}, {transform_indices = @transform_3, window_bounds = array<i64: 8, 8>}, {transform_indices = @transform_4, window_bounds = array<i64: 1, 8, 32>}]} {
    %c0_i32 = arith.constant 0 : i32
    %0 = arith.cmpi eq, %arg2, %c0_i32 : i32
    %1 = arith.extui %0 : i1 to i32
    %c0_i32_0 = arith.constant 0 : i32
    %2 = arith.cmpi ne, %1, %c0_i32_0 : i32
    scf.if %2 {
      %cst_28 = arith.constant 0xFF800000 : f32
      %37 = vector.broadcast %cst_28 : f32 to vector<8x1xf32>
      %c0_29 = arith.constant 0 : index
      %c0_30 = arith.constant 0 : index
      %38 = vector.load %arg8[%c0_29, %c0_30] : memref<8x1xf32, #tpu.memory_space<vmem>>, vector<8x1xf32>
      tpu.vector_store %arg8[%c0_29, %c0_30], %37 {strides = array<i32>} : memref<8x1xf32, #tpu.memory_space<vmem>>, vector<8x1xf32>,
      %cst_31 = arith.constant 0.000000e+00 : f32
      %39 = vector.broadcast %cst_31 : f32 to vector<8x1xf32>
      %c0_32 = arith.constant 0 : index
      %c0_33 = arith.constant 0 : index
      %40 = vector.load %arg9[%c0_32, %c0_33] : memref<8x1xf32, #tpu.memory_space<vmem>>, vector<8x1xf32>
      tpu.vector_store %arg9[%c0_32, %c0_33], %39 {strides = array<i32>} : memref<8x1xf32, #tpu.memory_space<vmem>>, vector<8x1xf32>,
      %cst_34 = arith.constant 0.000000e+00 : f32
      %41 = vector.broadcast %cst_34 : f32 to vector<8x32xf32>
      %c0_35 = arith.constant 0 : index
      %c0_36 = arith.constant 0 : index
      %42 = vector.load %arg10[%c0_35, %c0_36] : memref<8x32xf32, #tpu.memory_space<vmem>>, vector<8x32xf32>
      tpu.vector_store %arg10[%c0_35, %c0_36], %41 {strides = array<i32>} : memref<8x32xf32, #tpu.memory_space<vmem>>, vector<8x32xf32>,
    } else {
    }
    %c0 = arith.constant 0 : index
    %c0_1 = arith.constant 0 : index
    %c0_2 = arith.constant 0 : index
    %3 = vector.load %arg3[%c0, %c0_1, %c0_2] : memref<1x8x32xf32, #tpu.memory_space<vmem>>, vector<1x8x32xf32>
    %4 = vector.shape_cast %3 : vector<1x8x32xf32> to vector<8x32xf32>
    %c0_3 = arith.constant 0 : index
    %c0_4 = arith.constant 0 : index
    %c0_5 = arith.constant 0 : index
    %5 = vector.load %arg4[%c0_3, %c0_4, %c0_5] : memref<1x8x32xf32, #tpu.memory_space<vmem>>, vector<1x8x32xf32>
    %6 = vector.shape_cast %5 : vector<1x8x32xf32> to vector<8x32xf32>
    %c0_6 = arith.constant 0 : index
    %c0_7 = arith.constant 0 : index
    %c0_8 = arith.constant 0 : index
    %7 = vector.load %arg5[%c0_6, %c0_7, %c0_8] : memref<1x8x32xf32, #tpu.memory_space<vmem>>, vector<1x8x32xf32>
    %8 = vector.shape_cast %7 : vector<1x8x32xf32> to vector<8x32xf32>
    %c0_9 = arith.constant 0 : index
    %c0_10 = arith.constant 0 : index
    %9 = vector.load %arg6[%c0_9, %c0_10] : memref<8x8xf32, #tpu.memory_space<vmem>>, vector<8x8xf32>
    %cst = arith.constant dense<0.000000e+00> : vector<8x8xf32>
    %10 = tpu.matmul %4, %6, %cst {dimension_numbers = #tpu.dot_dimension_numbers<[1], [1], [0], [0], [0, 0, 1, 0], [], []>} : vector<8x32xf32>, vector<8x32xf32>, vector<8x8xf32> -> vector<8x8xf32>
    %11 = arith.mulf %10, %9 : vector<8x8xf32>
    %c0_11 = arith.constant 0 : index
    %c0_12 = arith.constant 0 : index
    %12 = vector.load %arg8[%c0_11, %c0_12] : memref<8x1xf32, #tpu.memory_space<vmem>>, vector<8x1xf32>
    %cst_13 = arith.constant dense<0xFF800000> : vector<8xf32>
    %13 = vector.multi_reduction <maximumf>, %11, %cst_13 [1] : vector<8x8xf32> to vector<8xf32>
    %14 = vector.shape_cast %13 : vector<8xf32> to vector<8x1xf32>
    %15 = arith.maximumf %12, %14 : vector<8x1xf32>
    %16 = arith.subf %12, %15 : vector<8x1xf32>
    %17 = math.exp %16 : vector<8x1xf32>
    %18 = vector.broadcast %15 : vector<8x1xf32> to vector<8x8xf32>
    %19 = arith.subf %11, %18 : vector<8x8xf32>
    %20 = math.exp %19 : vector<8x8xf32>
    %c0_14 = arith.constant 0 : index
    %c0_15 = arith.constant 0 : index
    %21 = vector.load %arg9[%c0_14, %c0_15] : memref<8x1xf32, #tpu.memory_space<vmem>>, vector<8x1xf32>
    %22 = arith.mulf %17, %21 : vector<8x1xf32>
    %cst_16 = arith.constant dense<0.000000e+00> : vector<8xf32>
    %23 = vector.multi_reduction <add>, %20, %cst_16 [1] : vector<8x8xf32> to vector<8xf32>
    %24 = vector.shape_cast %23 : vector<8xf32> to vector<8x1xf32>
    %25 = arith.addf %22, %24 : vector<8x1xf32>
    %c0_17 = arith.constant 0 : index
    %c0_18 = arith.constant 0 : index
    %26 = vector.load %arg9[%c0_17, %c0_18] : memref<8x1xf32, #tpu.memory_space<vmem>>, vector<8x1xf32>
    tpu.vector_store %arg9[%c0_17, %c0_18], %25 {strides = array<i32>} : memref<8x1xf32, #tpu.memory_space<vmem>>, vector<8x1xf32>,
    %c0_19 = arith.constant 0 : index
    %c0_20 = arith.constant 0 : index
    %27 = vector.load %arg10[%c0_19, %c0_20] : memref<8x32xf32, #tpu.memory_space<vmem>>, vector<8x32xf32>
    %28 = vector.broadcast %17 : vector<8x1xf32> to vector<8x32xf32>
    %29 = arith.mulf %28, %27 : vector<8x32xf32>
    %cst_21 = arith.constant dense<0.000000e+00> : vector<8x32xf32>
    %30 = tpu.matmul %20, %8, %cst_21 {dimension_numbers = #tpu.dot_dimension_numbers<[1], [0], [0], [1], [0, 0, 1, 1], [], []>} : vector<8x8xf32>, vector<8x32xf32>, vector<8x32xf32> -> vector<8x32xf32>
    %31 = arith.addf %29, %30 : vector<8x32xf32>
    %c0_22 = arith.constant 0 : index
    %c0_23 = arith.constant 0 : index
    %32 = vector.load %arg10[%c0_22, %c0_23] : memref<8x32xf32, #tpu.memory_space<vmem>>, vector<8x32xf32>
    tpu.vector_store %arg10[%c0_22, %c0_23], %31 {strides = array<i32>} : memref<8x32xf32, #tpu.memory_space<vmem>>, vector<8x32xf32>,
    %c0_24 = arith.constant 0 : index
    %c0_25 = arith.constant 0 : index
    %33 = vector.load %arg8[%c0_24, %c0_25] : memref<8x1xf32, #tpu.memory_space<vmem>>, vector<8x1xf32>
    tpu.vector_store %arg8[%c0_24, %c0_25], %15 {strides = array<i32>} : memref<8x1xf32, #tpu.memory_space<vmem>>, vector<8x1xf32>,
    %c0_i32_26 = arith.constant 0 : i32
    %34 = arith.cmpi eq, %arg2, %c0_i32_26 : i32
    %35 = arith.extui %34 : i1 to i32
    %c0_i32_27 = arith.constant 0 : i32
    %36 = arith.cmpi ne, %35, %c0_i32_27 : i32
    scf.if %36 {
      %c0_28 = arith.constant 0 : index
      %c0_29 = arith.constant 0 : index
      %37 = vector.load %arg10[%c0_28, %c0_29] : memref<8x32xf32, #tpu.memory_space<vmem>>, vector<8x32xf32>
      %c0_30 = arith.constant 0 : index
      %c0_31 = arith.constant 0 : index
      %38 = vector.load %arg9[%c0_30, %c0_31] : memref<8x1xf32, #tpu.memory_space<vmem>>, vector<8x1xf32>
      %39 = tpu.reciprocal %38 {approx = true} : vector<8x1xf32> -> vector<8x1xf32>
      %40 = vector.broadcast %39 : vector<8x1xf32> to vector<8x32xf32>
      %41 = arith.mulf %37, %40 : vector<8x32xf32>
      %c0_32 = arith.constant 0 : index
      %c0_33 = arith.constant 0 : index
      %c0_34 = arith.constant 0 : index
      %42 = vector.load %arg7[%c0_32, %c0_33, %c0_34] : memref<1x8x32xf32, #tpu.memory_space<vmem>>, vector<1x8x32xf32>
      %43 = vector.shape_cast %42 : vector<1x8x32xf32> to vector<8x32xf32>
      %44 = vector.shape_cast %41 : vector<8x32xf32> to vector<1x8x32xf32>
      tpu.vector_store %arg7[%c0_32, %c0_33, %c0_34], %44 {strides = array<i32>} : memref<1x8x32xf32, #tpu.memory_space<vmem>>, vector<1x8x32xf32>,
    } else {
    }
    return
  }
  func.func @transform_0(%arg0: i32, %arg1: i32, %arg2: i32) -> (i32, i32, i32) {
    %c0_i32 = arith.constant 0 : i32
    %c0_i32_0 = arith.constant 0 : i32
    return %arg0, %arg1, %c0_i32 : i32, i32, i32
  }
  func.func @transform_1(%arg0: i32, %arg1: i32, %arg2: i32) -> (i32, i32, i32) {
    %c0_i32 = arith.constant 0 : i32
    %c0_i32_0 = arith.constant 0 : i32
    return %arg0, %arg2, %c0_i32 : i32, i32, i32
  }
  func.func @transform_2(%arg0: i32, %arg1: i32, %arg2: i32) -> (i32, i32, i32) {
    %c0_i32 = arith.constant 0 : i32
    %c0_i32_0 = arith.constant 0 : i32
    return %arg0, %arg2, %c0_i32 : i32, i32, i32
  }
  func.func @transform_3(%arg0: i32, %arg1: i32, %arg2: i32) -> (i32, i32) {
    %c0_i32 = arith.constant 0 : i32
    return %arg1, %arg2 : i32, i32
  }
  func.func @transform_4(%arg0: i32, %arg1: i32, %arg2: i32) -> (i32, i32, i32) {
    %c0_i32 = arith.constant 0 : i32
    %c0_i32_0 = arith.constant 0 : i32
    return %arg0, %arg1, %c0_i32 : i32, i32, i32
  }
}

</mosaic_0001>

<llo_original>
// kernel: tpu_custom_call.1
$region0: #{tpu_custom_call.1}
  #allocation0 [shape = 'u32[]', space=smem, size = 0x4, offset = 0x4, fixed_abs, tag = 'smem constant byte address 0x4 - core index']
  #allocation1 [shape = 'u32[144,128]{1,0:T(1,128)}', space=vmem, size = 0x12000, scoped, tag = 'internal scratch']
  #allocation2 [shape = 'f32[8,1]{1,0:T(8,128)}', space=vmem, size = 0x1000, scoped, tag = 'scratch operand']
  #allocation3 [shape = 'f32[8,1]{1,0:T(8,128)}', space=vmem, size = 0x1000, scoped, tag = 'scratch operand']
  #allocation4 [shape = 'f32[8,32]{1,0:T(8,128)}', space=vmem, size = 0x1000, scoped, tag = 'scratch operand']
  %s0 = inlined_call_operand.hbm [shape: f32[4,8,32], index: 0, kind: input, shape index: {}]
  %s1 = inlined_call_operand.hbm [shape: f32[4,8,32], index: 1, kind: input, shape index: {}]
  %s2 = inlined_call_operand.hbm [shape: f32[4,8,32], index: 2, kind: input, shape index: {}]
  %s3 = inlined_call_operand.vmem [shape: f32[8,8], index: 3, kind: input, shape index: {}]
  %s4 = inlined_call_operand.hbm [shape: f32[4,8,32], index: 4, kind: output, shape index: {}]
  %s5 = sld [smem:[#allocation0]]
  $region69: #{tpu_custom_call.1} parent=0
    _
  %s7 = ssub.s32 1, %s5
  %s8 = scalar_select 0, %s7, %s5
  $region1: #{tpu_custom_call.1} parent=0
    #allocation5 [shape = 'u8[8192]{0}', space=vmem, size = 0x2000, scoped, tag = 'input window, operand 0']
    #allocation6 [shape = 's32[2]{0}', space=sflag, size = 0x8, scoped, tag = 'scoped memory for tpu_custom_call.1']
    #allocation7 [shape = 's32[2]{0}', space=sflag, size = 0x8, scoped, tag = 'scoped memory for tpu_custom_call.1']
    #allocation8 [shape = 'u8[8192]{0}', space=vmem, size = 0x2000, scoped, tag = 'input window, operand 1']
    #allocation9 [shape = 's32[2]{0}', space=sflag, size = 0x8, scoped, tag = 'scoped memory for tpu_custom_call.1']
    #allocation10 [shape = 'u8[8192]{0}', space=vmem, size = 0x2000, scoped, tag = 'input window, operand 2']
    #allocation11 [shape = 'u8[8192]{0}', space=vmem, size = 0x2000, scoped, tag = 'output window, operand 0']
    %9 = vsyncpa [#allocation6], 0
    %s10 = scalar_lea.sflag [#allocation6], 1
    %11 = vsyncpa %s10, 0
    %12 = vsyncpa [#allocation9], 0
    %s13 = scalar_lea.sflag [#allocation9], 1
    %14 = vsyncpa %s13, 0
    %15 = vsyncpa [#allocation7], 0
    %s16 = scalar_lea.sflag [#allocation7], 1
    %17 = vsyncpa %s16, 0
    loop: start=0, step=1, limit=6
    $region2: #{tpu_custom_call.1} parent=1 // loop_pre_header
      _
    $region3: #{tpu_custom_call.1} parent=1 // loop_header
      %s19 = sphi 0, %s23
      %p20 = scmp.ge.s32.totalorder %s19, 6
      %s26 = sphi 0, %s45
      %s27 = sphi 0, %s41
      %s28 = sphi 0, %s37
      %s29 = sphi 0, %s26
      %s30 = sphi 0, %s27
      %s31 = sphi 0, %s28
      %s32 = sphi 0, %s29
      %s33 = sphi 0, %s30
      %s34 = sphi 0, %s31
      %s50 = sphi 0, %s52
      %s53 = sphi 0, %s50
      %s54 = sphi 0, %s53
      %s70 = sphi 0, %s54
      %s78 = sphi 0, %s80
      %s81 = sphi 0, %s78
      %s82 = sphi 0, %s81
      %s98 = sphi 0, %s82
      %s106 = sphi 0, %s108
      %s109 = sphi 0, %s106
      %s110 = sphi 0, %s109
      %s126 = sphi 0, %s110
      %s134 = sphi 0, %s136
      %s137 = sphi 0, %s134
      %s138 = sphi 0, %s137
      %s154 = sphi 0, %s138
      %s162 = sphi 0, %s164
      %s165 = sphi 0, %s162
      %s166 = sphi 0, %s165
      %s182 = sphi 0, %s166
    $region4: #{tpu_custom_call.1} parent=1 // loop_header_branch
      %22 = sbr.rel (%p20) target = $region8
    $region5: #{tpu_custom_call.1} parent=1 // loop_body
      %s24 = ssub.s32 %s19, 1
      %s25 = ssub.s32 %s19, 2
      %s35 = sadd.s32 1, %s28
      %p36 = scmp.ge.s32.totalorder %s35, 1
      %s37 = scalar_select %p36, 0, %s35
      %s38 = sadd.s32 1, %s27
      %s39 = scalar_select %p36, %s38, %s27
      %p40 = scmp.ge.s32.totalorder %s39, 1
      %s41 = scalar_select %p40, 0, %s39
      %s42 = sadd.s32 1, %s26
      %s43 = scalar_select %p40, %s42, %s26
      %p44 = scmp.ge.s32.totalorder %s43, 4
      %s45 = scalar_select %p44, 0, %s43
      %s46 = ssub.s32 %s26, %s45
      %s47 = ssub.s32 %s27, %s41
      %s48 = sor.u32 %s46, %s47
      %p49 = scmp.eq.s32.totalorder %s48, 0
      %s51 = sadd.s32 %s50, 1
      %s52 = scalar_select %p49, %s50, %s51
      %p55 = pneg %p49
      %p56 = scmp.eq.s32.totalorder %s19, 3
      %p57 = por %p55, %p56
      %p58 = scmp.ne.s32.totalorder %s50, %s53
      %p59 = scmp.eq.s32.totalorder %s19, 0
      %p60 = por %p58, %p59
      %p61 = scmp.ne.s32.totalorder %s50, %s53
      %p62 = scmp.eq.s32.totalorder %s24, 3
      %p63 = por %p61, %p62
      %p64 = scmp.ne.s32.totalorder %s53, %s54
      %p65 = scmp.eq.s32.totalorder %s24, 0
      %p66 = por %p64, %p65
      %p67 = scmp.ne.s32.totalorder %s53, %s54
      %p68 = scmp.eq.s32.totalorder %s25, 3
      %p69 = por %p67, %p68
      %p71 = scmp.ne.s32.totalorder %s54, %s70
      %p72 = scmp.eq.s32.totalorder %s25, 0
      %p73 = por %p71, %p72
      %s74 = ssub.s32 %s26, %s45
      %s75 = ssub.s32 %s28, %s37
      %s76 = sor.u32 %s74, %s75
      %p77 = scmp.eq.s32.totalorder %s76, 0
      %s79 = sadd.s32 %s78, 1
      %s80 = scalar_select %p77, %s78, %s79
      %p83 = pneg %p77
      %p84 = scmp.eq.s32.totalorder %s19, 3
      %p85 = por %p83, %p84
      %p86 = scmp.ne.s32.totalorder %s78, %s81
      %p87 = scmp.eq.s32.totalorder %s19, 0
      %p88 = por %p86, %p87
      %p89 = scmp.ne.s32.totalorder %s78, %s81
      %p90 = scmp.eq.s32.totalorder %s24, 3
      %p91 = por %p89, %p90
      %p92 = scmp.ne.s32.totalorder %s81, %s82
      %p93 = scmp.eq.s32.totalorder %s24, 0
      %p94 = por %p92, %p93
      %p95 = scmp.ne.s32.totalorder %s81, %s82
      %p96 = scmp.eq.s32.totalorder %s25, 3
      %p97 = por %p95, %p96
      %p99 = scmp.ne.s32.totalorder %s82, %s98
      %p100 = scmp.eq.s32.totalorder %s25, 0
      %p101 = por %p99, %p100
      %s102 = ssub.s32 %s26, %s45
      %s103 = ssub.s32 %s28, %s37
      %s104 = sor.u32 %s102, %s103
      %p105 = scmp.eq.s32.totalorder %s104, 0
      %s107 = sadd.s32 %s106, 1
      %s108 = scalar_select %p105, %s106, %s107
      %p111 = pneg %p105
      %p112 = scmp.eq.s32.totalorder %s19, 3
      %p113 = por %p111, %p112
      %p114 = scmp.ne.s32.totalorder %s106, %s109
      %p115 = scmp.eq.s32.totalorder %s19, 0
      %p116 = por %p114, %p115
      %p117 = scmp.ne.s32.totalorder %s106, %s109
      %p118 = scmp.eq.s32.totalorder %s24, 3
      %p119 = por %p117, %p118
      %p120 = scmp.ne.s32.totalorder %s109, %s110
      %p121 = scmp.eq.s32.totalorder %s24, 0
      %p122 = por %p120, %p121
      %p123 = scmp.ne.s32.totalorder %s109, %s110
      %p124 = scmp.eq.s32.totalorder %s25, 3
      %p125 = por %p123, %p124
      %p127 = scmp.ne.s32.totalorder %s110, %s126
      %p128 = scmp.eq.s32.totalorder %s25, 0
      %p129 = por %p127, %p128
      %s130 = ssub.s32 %s27, %s41
      %s131 = ssub.s32 %s28, %s37
      %s132 = sor.u32 %s130, %s131
      %p133 = scmp.eq.s32.totalorder %s132, 0
      %s135 = sadd.s32 %s134, 1
      %s136 = scalar_select %p133, %s134, %s135
      %p139 = pneg %p133
      %p140 = scmp.eq.s32.totalorder %s19, 3
      %p141 = por %p139, %p140
      %p142 = scmp.ne.s32.totalorder %s134, %s137
      %p143 = scmp.eq.s32.totalorder %s19, 0
      %p144 = por %p142, %p143
      %p145 = scmp.ne.s32.totalorder %s134, %s137
      %p146 = scmp.eq.s32.totalorder %s24, 3
      %p147 = por %p145, %p146
      %p148 = scmp.ne.s32.totalorder %s137, %s138
      %p149 = scmp.eq.s32.totalorder %s24, 0
      %p150 = por %p148, %p149
      %p151 = scmp.ne.s32.totalorder %s137, %s138
      %p152 = scmp.eq.s32.totalorder %s25, 3
      %p153 = por %p151, %p152
      %p155 = scmp.ne.s32.totalorder %s138, %s154
      %p156 = scmp.eq.s32.totalorder %s25, 0
      %p157 = por %p155, %p156
      %s158 = ssub.s32 %s26, %s45
      %s159 = ssub.s32 %s27, %s41
      %s160 = sor.u32 %s158, %s159
      %p161 = scmp.eq.s32.totalorder %s160, 0
      %s163 = sadd.s32 %s162, 1
      %s164 = scalar_select %p161, %s162, %s163
      %p167 = pneg %p161
      %p168 = scmp.eq.s32.totalorder %s19, 3
      %p169 = por %p167, %p168
      %p170 = scmp.ne.s32.totalorder %s162, %s165
      %p171 = scmp.eq.s32.totalorder %s19, 0
      %p172 = por %p170, %p171
      %p173 = scmp.ne.s32.totalorder %s162, %s165
      %p174 = scmp.eq.s32.totalorder %s24, 3
      %p175 = por %p173, %p174
      %p176 = scmp.ne.s32.totalorder %s165, %s166
      %p177 = scmp.eq.s32.totalorder %s24, 0
      %p178 = por %p176, %p177
      %p179 = scmp.ne.s32.totalorder %s165, %s166
      %p180 = scmp.eq.s32.totalorder %s25, 3
      %p181 = por %p179, %p180
      %p183 = scmp.ne.s32.totalorder %s166, %s182
      %p184 = scmp.eq.s32.totalorder %s25, 0
      %p185 = por %p183, %p184
      %p186 = scmp.le.s32.totalorder 1, %s19
      %p187 = scmp.lt.s32.totalorder %s19, 5
      %p188 = pnand %p186, %p187
      %p189 = pneg %p188
      // Predicated region
      $region9: #{tpu_custom_call.1} parent=5 // pred_check
        _
      $region10: #{tpu_custom_call.1} parent=5 // pred_check_branch
        %191 = sbr.rel (%p188) target = $region12
      $region11: #{tpu_custom_call.1} parent=5 // pred_region
        %s192 = ssub.s32 %s19, 1
        // Predicated region
        $region13: #{tpu_custom_call.1} parent=11 // pred_check
          %p193 = pneg %p150
        $region14: #{tpu_custom_call.1} parent=11 // pred_check_branch
          %195 = sbr.rel (%p193) target = $region16
        $region15: #{tpu_custom_call.1} parent=11 // pred_region
          %p196 = scmp.lt.s32.totalorder %s30, 0
          %s197 = scalar_select %p196, %s30, 0
          %p198 = scmp.lt.s32.totalorder %s31, 0
          %s199 = scalar_select %p198, %s31, 0
          %s200 = sadd.s32 %s199, %s197
          %s201 = smul.addr %s200, 8
          %s202 = scalar_lea.vmem %s3, %s201
        $region16: #{tpu_custom_call.1} parent=11 // pred_fallthru
          _
      $region12: #{tpu_custom_call.1} parent=5 // pred_fallthru
        _
      %p203 = scmp.lt.s32.totalorder %s19, 4
      // Predicated region
      $region17: #{tpu_custom_call.1} parent=5 // pred_check
        %p204 = pneg %p203
      $region18: #{tpu_custom_call.1} parent=5 // pred_check_branch
        %206 = sbr.rel (%p204) target = $region20
      $region19: #{tpu_custom_call.1} parent=5 // pred_region
        // Predicated region
        $region21: #{tpu_custom_call.1} parent=19 // pred_check
          %p207 = pneg %p60
        $region22: #{tpu_custom_call.1} parent=19 // pred_check_branch
          %209 = sbr.rel (%p207) target = $region24
        $region23: #{tpu_custom_call.1} parent=19 // pred_region
          %s210 = sand.u32 %s50, 1
          %s211 = scalar_lea.sflag [#allocation6], %s210
          %s212 = sand.u32 %s50, 1
          %s213 = smul.addr %s212, 8
          %s214 = scalar_lea.vmem [#allocation5], %s213
          %s216 = ssub.s32 128, 128
          %217 = vsyncadd %s211, %s216
          %s218 = sadd.s32 %s27, %s26
          %s219 = smul.addr %s218, 128
          %s220 = scalar_lea.hbm %s0, %s219
          %s222 = sshll.u32 %s214, 4
          %s223 = int_to_ptr.vmem [resolvable:$true] %s222
          %225 = dma.hbm_to_vmem [thread:$0]  %s220, 128, %s223, %s211
        $region24: #{tpu_custom_call.1} parent=19 // pred_fallthru
          _
        // Predicated region
        $region25: #{tpu_custom_call.1} parent=19 // pred_check
          %p226 = pneg %p88
        $region26: #{tpu_custom_call.1} parent=19 // pred_check_branch
          %228 = sbr.rel (%p226) target = $region28
        $region27: #{tpu_custom_call.1} parent=19 // pred_region
          %s229 = sand.u32 %s19, 1
          %s230 = scalar_lea.sflag [#allocation9], %s229
          %s231 = sand.u32 %s78, 1
          %s232 = smul.addr %s231, 8
          %s233 = scalar_lea.vmem [#allocation8], %s232
          %s235 = ssub.s32 128, 128
          %236 = vsyncadd %s230, %s235
          %s237 = sadd.s32 %s28, %s26
          %s238 = smul.addr %s237, 128
          %s239 = scalar_lea.hbm %s1, %s238
          %s241 = sshll.u32 %s233, 4
          %s242 = int_to_ptr.vmem [resolvable:$true] %s241
          %244 = dma.hbm_to_vmem [thread:$0]  %s239, 128, %s242, %s230
        $region28: #{tpu_custom_call.1} parent=19 // pred_fallthru
          _
        // Predicated region
        $region29: #{tpu_custom_call.1} parent=19 // pred_check
          %p245 = pneg %p116
        $region30: #{tpu_custom_call.1} parent=19 // pred_check_branch
          %247 = sbr.rel (%p245) target = $region32
        $region31: #{tpu_custom_call.1} parent=19 // pred_region
          %s248 = sand.u32 %s19, 1
          %s249 = scalar_lea.sflag [#allocation9], %s248
          %s250 = sand.u32 %s106, 1
          %s251 = smul.addr %s250, 8
          %s252 = scalar_lea.vmem [#allocation10], %s251
          %s254 = ssub.s32 128, 128
          %255 = vsyncadd %s249, %s254
          %s256 = sadd.s32 %s28, %s26
          %s257 = smul.addr %s256, 128
          %s258 = scalar_lea.hbm %s2, %s257
          %s260 = sshll.u32 %s252, 4
          %s261 = int_to_ptr.vmem [resolvable:$true] %s260
          %263 = dma.hbm_to_vmem [thread:$0]  %s258, 128, %s261, %s249
        $region32: #{tpu_custom_call.1} parent=19 // pred_fallthru
          _
      $region20: #{tpu_custom_call.1} parent=5 // pred_fallthru
        _
      %p264 = scmp.le.s32.totalorder 1, %s19
      %p265 = scmp.lt.s32.totalorder %s19, 5
      %p266 = pnand %p264, %p265
      %p267 = pneg %p266
      // Predicated region
      $region33: #{tpu_custom_call.1} parent=5 // pred_check
        _
      $region34: #{tpu_custom_call.1} parent=5 // pred_check_branch
        %269 = sbr.rel (%p266) target = $region36
      $region35: #{tpu_custom_call.1} parent=5 // pred_region
        %s270 = ssub.s32 %s19, 1
        %s271 = sand.u32 %s53, 1
        %s272 = scalar_lea.sflag [#allocation6], %s271
        %s273 = sand.u32 %s53, 1
        %s274 = smul.addr %s273, 8
        %s275 = scalar_lea.vmem [#allocation5], %s274
        // Predicated region
        $region37: #{tpu_custom_call.1} parent=35 // pred_check
          %p276 = pneg %p66
        $region38: #{tpu_custom_call.1} parent=35 // pred_check_branch
          %278 = sbr.rel (%p276) target = $region40
        $region39: #{tpu_custom_call.1} parent=35 // pred_region
          %279 = dma.done %s272, 128
        $region40: #{tpu_custom_call.1} parent=35 // pred_fallthru
          _
        %s280 = sand.u32 %s24, 1
        %s281 = scalar_lea.sflag [#allocation9], %s280
        %s282 = sand.u32 %s81, 1
        %s283 = smul.addr %s282, 8
        %s284 = scalar_lea.vmem [#allocation8], %s283
        // Predicated region
        $region41: #{tpu_custom_call.1} parent=35 // pred_check
          %p285 = pneg %p94
        $region42: #{tpu_custom_call.1} parent=35 // pred_check_branch
          %287 = sbr.rel (%p285) target = $region44
        $region43: #{tpu_custom_call.1} parent=35 // pred_region
          %288 = dma.done %s281, 128
        $region44: #{tpu_custom_call.1} parent=35 // pred_fallthru
          _
        %s289 = sand.u32 %s24, 1
        %s290 = scalar_lea.sflag [#allocation9], %s289
        %s291 = sand.u32 %s109, 1
        %s292 = smul.addr %s291, 8
        %s293 = scalar_lea.vmem [#allocation10], %s292
        // Predicated region
        $region45: #{tpu_custom_call.1} parent=35 // pred_check
          %p294 = pneg %p122
        $region46: #{tpu_custom_call.1} parent=35 // pred_check_branch
          %296 = sbr.rel (%p294) target = $region48
        $region47: #{tpu_custom_call.1} parent=35 // pred_region
          %297 = dma.done %s290, 128
        $region48: #{tpu_custom_call.1} parent=35 // pred_fallthru
          _
        %s298 = sand.u32 %s53, 1
        %s299 = scalar_lea.sflag [#allocation6], %s298
        %s300 = sand.u32 %s53, 1
        %s301 = smul.addr %s300, 8
        %s302 = scalar_lea.vmem [#allocation5], %s301
        %p303 = pneg %p66
        %p304 = pneg %p63
        %s305 = sand.u32 %s24, 1
        %s306 = scalar_lea.sflag [#allocation9], %s305
        %s307 = sand.u32 %s81, 1
        %s308 = smul.addr %s307, 8
        %s309 = scalar_lea.vmem [#allocation8], %s308
        %p310 = pneg %p94
        %p311 = pneg %p91
        %s312 = sand.u32 %s24, 1
        %s313 = scalar_lea.sflag [#allocation9], %s312
        %s314 = sand.u32 %s109, 1
        %s315 = smul.addr %s314, 8
        %s316 = scalar_lea.vmem [#allocation10], %s315
        %p317 = pneg %p122
        %p318 = pneg %p119
        %p319 = scmp.lt.s32.totalorder %s30, 0
        %s320 = scalar_select %p319, %s30, 0
        %p321 = scmp.lt.s32.totalorder %s31, 0
        %s322 = scalar_select %p321, %s31, 0
        %s323 = sadd.s32 %s322, %s320
        %s324 = smul.addr %s323, 8
        %s325 = scalar_lea.vmem %s3, %s324
        %p326 = pneg %p150
        %p327 = pneg %p147
        %p328 = pneg %p178
        %p329 = pneg %p175
        %s330 = sand.u32 %s165, 1
        %s331 = scalar_lea.sflag [#allocation7], %s330
        %s332 = sand.u32 %s165, 1
        %s333 = smul.addr %s332, 8
        %s334 = scalar_lea.vmem [#allocation11], %s333
        %p335 = scmp.lt.s32.totalorder %s30, 0
        %s336 = scalar_select %p335, %s30, 0
        %p337 = scmp.lt.s32.totalorder %s31, 0
        %s338 = scalar_select %p337, %s31, 0
        %s339 = sadd.s32 %s338, %s336
        %s340 = smul.addr %s339, 8
        %s341 = scalar_lea.vmem %s3, %s340
        %p342 = scmp.eq.s32.totalorder %s31, 0
        // Predicated region
        $region49: #{tpu_custom_call.1} parent=35 // pred_check
          %p343 = pneg %p342
        $region50: #{tpu_custom_call.1} parent=35 // pred_check_branch
          %345 = sbr.rel (%p343) target = $region52
        $region51: #{tpu_custom_call.1} parent=35 // pred_region
          %vm346 = vcmask 7168
          %347 = vst.msk [vmem:[#allocation2] sm:$0xff] %vm346, -inf
          %348 = vst.msk [vmem:[#allocation3] sm:$0xff] %vm346, 0.0
          %vm349 = vcmask 261120
          %350 = vst.msk [vmem:[#allocation4] sm:$0xff] %vm349, 0.0
        $region52: #{tpu_custom_call.1} parent=35 // pred_fallthru
          _
        %v351 = vld [vmem:[%s275] sm:$0xff]
        %v352 = vld [vmem:[%s284] sm:$0xff]
        %v353 = vld [vmem:[%s293] sm:$0xff]
        %v354 = vld [vmem:[%s341] sm:$0xff]
        %vm355 = vcmask 261120
        %v357 = vsel %vm355, %v351, 0
        %v360 = vsel %vm355, %v352, 0
        %362 = vmatprep.subr.mxu0 0.0
        %363 = vmatpush1.xpose.msra.mxu0 %v360
        %364 = vmatprep.subr.mxu0 0.0
        %365 = vmatpush1.xpose.msra.mxu0 0.0
        %366 = vmatprep.subr.mxu0 0.0
        %367 = vmatpush1.xpose.msra.mxu0 0.0
        %368 = vmatprep.subr.mxu0 0.0
        %369 = vmatpush1.xpose.msra.mxu0 0.0
        %370 = vmatprep.subr.mxu0 0.0
        %371 = vmatpush1.xpose.msra.mxu0 0.0
        %372 = vmatprep.subr.mxu0 0.0
        %373 = vmatpush1.xpose.msra.mxu0 0.0
        %374 = vmatprep.subr.mxu0 0.0
        %375 = vmatpush1.xpose.msra.mxu0 0.0
        %376 = vmatprep.subr.mxu0 0.0
        %377 = vmatpush1.xpose.msra.mxu0 0.0
        %378 = vmatprep.subr.mxu0 0.0
        %379 = vmatpush1.xpose.msra.mxu0 0.0
        %380 = vmatprep.subr.mxu0 0.0
        %381 = vmatpush1.xpose.msra.mxu0 0.0
        %382 = vmatprep.subr.mxu0 0.0
        %383 = vmatpush1.xpose.msra.mxu0 0.0
        %384 = vmatprep.subr.mxu0 0.0
        %385 = vmatpush1.xpose.msra.mxu0 0.0
        %386 = vmatprep.subr.mxu0 0.0
        %387 = vmatpush1.xpose.msra.mxu0 0.0
        %388 = vmatprep.subr.mxu0 0.0
        %389 = vmatpush1.xpose.msra.mxu0 0.0
        %390 = vmatprep.subr.mxu0 0.0
        %391 = vmatpush1.xpose.msra.mxu0 0.0
        %392 = vmatprep.subr.mxu0 0.0
        %393 = vmatpush1.xpose.msra.mxu0 0.0
        %394 = vmatprep.subr.mxu0 0.0
        %395 = vmatpush1.xpose.msra.mxu0 0.0
        %396 = vmatprep.subr.mxu0 0.0
        %397 = vmatpush1.xpose.msra.mxu0 0.0
        %398 = vmatprep.subr.mxu0 0.0
        %399 = vmatpush1.xpose.msra.mxu0 0.0
        %400 = vmatprep.subr.mxu0 0.0
        %401 = vmatpush1.xpose.msra.mxu0 0.0
        %402 = vmatprep.subr.mxu0 0.0
        %403 = vmatpush1.xpose.msra.mxu0 0.0
        %404 = vmatprep.subr.mxu0 0.0
        %405 = vmatpush1.xpose.msra.mxu0 0.0
        %406 = vmatprep.subr.mxu0 0.0
        %407 = vmatpush1.xpose.msra.mxu0 0.0
        %408 = vmatprep.subr.mxu0 0.0
        %409 = vmatpush1.xpose.msra.mxu0 0.0
        %410 = vmatprep.subr.mxu0 0.0
        %411 = vmatpush1.xpose.msra.mxu0 0.0
        %412 = vmatprep.subr.mxu0 0.0
        %413 = vmatpush1.xpose.msra.mxu0 0.0
        %414 = vmatprep.subr.mxu0 0.0
        %415 = vmatpush1.xpose.msra.mxu0 0.0
        %416 = vmatprep.subr.mxu0 0.0
        %417 = vmatpush1.xpose.msra.mxu0 0.0
        %418 = vmatprep.subr.mxu0 0.0
        %419 = vmatpush1.xpose.msra.mxu0 0.0
        %420 = vmatprep.subr.mxu0 0.0
        %421 = vmatpush1.xpose.msra.mxu0 0.0
        %422 = vmatprep.subr.mxu0 0.0
        %423 = vmatpush1.xpose.msra.mxu0 0.0
        %424 = vmatprep.subr.mxu0 0.0
        %425 = vmatpush1.xpose.msra.mxu0 0.0
        %426 = vmatprep.mubr.f32.mxu0 0.0
        %427 = vmatmul.mubr.f32.gmra.mrb[0].mxu0 %v357
        %v428 = vpop.f32.mrb[0].mxu0
        %v429 = vadd.f32 0.0, %v428
        %v430 = vpop.f32.mrb[0].mxu0
        %431 = vdwg.mxu0
        %v432 = vmul.f32 %v429, %v354
        %v433 = vld [vmem:[#allocation2] sm:$0xff]
        %vm434 = vcmask 64512
        %v435 = vsel %vm434, %v432, -inf
        %436 = vmax.xlane.f32.xlu0 %v435
        %v437 = vpop.xlane.xlu0 %436
        %v438 = vmax.f32 %v433, %v437
        %v439 = vsub.f32 %v433, %v438
        %v440 = vmul.f32 %v439, 1.442695
        %v441 = vpow.pop %v440
        %443 = vset.pattern.permute.xlu0 0
        %444 = vperm.xlu0 %443, %v438
        %v445 = vpop.permute.xlu0 %444
        %v447 = vsub.f32 %v432, %v445
        %v448 = vmul.f32 %v447, 1.442695
        %v449 = vpow.pop %v448
        %v450 = vld [vmem:[#allocation3] sm:$0xff]
        %v451 = vmul.f32 %v441, %v450
        %v452 = vsel %vm434, %v449, 0.0
        %453 = vadd.xlane.f32.xlu0 %v452
        %v454 = vpop.xlane.xlu0 %453
        %v455 = vadd.f32 %v451, %v454
        %vm456 = vcmask 7168
        %457 = vst.msk [vmem:[#allocation3] sm:$0xff] %vm456, %v455
        %v458 = vld [vmem:[#allocation4] sm:$0xff]
        %460 = vset.pattern.permute.xlu0 0
        %461 = vperm.xlu0 %460, %v441
        %v462 = vpop.permute.xlu0 %461
        %v464 = vmul.f32 %v462, %v458
        %v466 = vsel %vm434, %v449, 0
        %468 = vmatprep.subr.mxu0 0.0
        %469 = vmatpush1.msra.mxu0 %v353
        %470 = vmatprep.subr.mxu0 0.0
        %471 = vmatpush1.msra.mxu0 0.0
        %472 = vmatprep.subr.mxu0 0.0
        %473 = vmatpush1.msra.mxu0 0.0
        %474 = vmatprep.subr.mxu0 0.0
        %475 = vmatpush1.msra.mxu0 0.0
        %476 = vmatprep.subr.mxu0 0.0
        %477 = vmatpush1.msra.mxu0 0.0
        %478 = vmatprep.subr.mxu0 0.0
        %479 = vmatpush1.msra.mxu0 0.0
        %480 = vmatprep.subr.mxu0 0.0
        %481 = vmatpush1.msra.mxu0 0.0
        %482 = vmatprep.subr.mxu0 0.0
        %483 = vmatpush1.msra.mxu0 0.0
        %484 = vmatprep.subr.mxu0 0.0
        %485 = vmatpush1.msra.mxu0 0.0
        %486 = vmatprep.subr.mxu0 0.0
        %487 = vmatpush1.msra.mxu0 0.0
        %488 = vmatprep.subr.mxu0 0.0
        %489 = vmatpush1.msra.mxu0 0.0
        %490 = vmatprep.subr.mxu0 0.0
        %491 = vmatpush1.msra.mxu0 0.0
        %492 = vmatprep.subr.mxu0 0.0
        %493 = vmatpush1.msra.mxu0 0.0
        %494 = vmatprep.subr.mxu0 0.0
        %495 = vmatpush1.msra.mxu0 0.0
        %496 = vmatprep.subr.mxu0 0.0
        %497 = vmatpush1.msra.mxu0 0.0
        %498 = vmatprep.subr.mxu0 0.0
        %499 = vmatpush1.msra.mxu0 0.0
        %500 = vmatprep.subr.mxu0 0.0
        %501 = vmatpush1.msra.mxu0 0.0
        %502 = vmatprep.subr.mxu0 0.0
        %503 = vmatpush1.msra.mxu0 0.0
        %504 = vmatprep.subr.mxu0 0.0
        %505 = vmatpush1.msra.mxu0 0.0
        %506 = vmatprep.subr.mxu0 0.0
        %507 = vmatpush1.msra.mxu0 0.0
        %508 = vmatprep.subr.mxu0 0.0
        %509 = vmatpush1.msra.mxu0 0.0
        %510 = vmatprep.subr.mxu0 0.0
        %511 = vmatpush1.msra.mxu0 0.0
        %512 = vmatprep.subr.mxu0 0.0
        %513 = vmatpush1.msra.mxu0 0.0
        %514 = vmatprep.subr.mxu0 0.0
        %515 = vmatpush1.msra.mxu0 0.0
        %516 = vmatprep.subr.mxu0 0.0
        %517 = vmatpush1.msra.mxu0 0.0
        %518 = vmatprep.subr.mxu0 0.0
        %519 = vmatpush1.msra.mxu0 0.0
        %520 = vmatprep.subr.mxu0 0.0
        %521 = vmatpush1.msra.mxu0 0.0
        %522 = vmatprep.subr.mxu0 0.0
        %523 = vmatpush1.msra.mxu0 0.0
        %524 = vmatprep.subr.mxu0 0.0
        %525 = vmatpush1.msra.mxu0 0.0
        %526 = vmatprep.subr.mxu0 0.0
        %527 = vmatpush1.msra.mxu0 0.0
        %528 = vmatprep.subr.mxu0 0.0
        %529 = vmatpush1.msra.mxu0 0.0
        %530 = vmatprep.subr.mxu0 0.0
        %531 = vmatpush1.msra.mxu0 0.0
        %532 = vmatprep.mubr.f32.mxu0 0.0
        %533 = vmatmul.mubr.f32.gmra.mrb[0].mxu0 %v466
        %v534 = vpop.f32.mrb[0].mxu0
        %v535 = vadd.f32 0.0, %v534
        %v536 = vpop.f32.mrb[0].mxu0
        %537 = vdwg.mxu0
        %v538 = vadd.f32 %v464, %v535
        %539 = vst.msk [vmem:[#allocation4] sm:$0xff] %vm355, %v538
        %540 = vst.msk [vmem:[#allocation2] sm:$0xff] %vm456, %v438
        // Predicated region
        $region53: #{tpu_custom_call.1} parent=35 // pred_check
          %p541 = pneg %p342
        $region54: #{tpu_custom_call.1} parent=35 // pred_check_branch
          %543 = sbr.rel (%p541) target = $region56
        $region55: #{tpu_custom_call.1} parent=35 // pred_region
          %v544 = vld [vmem:[#allocation4] sm:$0xff]
          %v545 = vld [vmem:[#allocation3] sm:$0xff]
          %v546 = vrcp.pop %v545
          %548 = vset.pattern.permute.xlu0 0
          %549 = vperm.xlu0 %548, %v546
          %v550 = vpop.permute.xlu0 %549
          %v552 = vmul.f32 %v544, %v550
          %553 = vst.msk [vmem:[%s334] sm:$0xff] %vm355, %v552
        $region56: #{tpu_custom_call.1} parent=35 // pred_fallthru
          _
        %s554 = sand.u32 %s165, 1
        %s555 = scalar_lea.sflag [#allocation7], %s554
        %s556 = sand.u32 %s165, 1
        %s557 = smul.addr %s556, 8
        %s558 = scalar_lea.vmem [#allocation11], %s557
        // Predicated region
        $region57: #{tpu_custom_call.1} parent=35 // pred_check
          %p559 = pneg %p175
        $region58: #{tpu_custom_call.1} parent=35 // pred_check_branch
          %561 = sbr.rel (%p559) target = $region60
        $region59: #{tpu_custom_call.1} parent=35 // pred_region
          %s563 = ssub.s32 128, 128
          %564 = vsyncadd %s555, %s563
          %s565 = sadd.s32 %s30, %s29
          %s566 = smul.addr %s565, 128
          %s567 = scalar_lea.hbm %s4, %s566
          %s569 = sshll.u32 %s558, 4
          %s570 = int_to_ptr.vmem [resolvable:$true] %s569
          %572 = dma.vmem_to_hbm [thread:$0]  %s570, 128, %s567, %s555
        $region60: #{tpu_custom_call.1} parent=35 // pred_fallthru
          _
      $region36: #{tpu_custom_call.1} parent=5 // pred_fallthru
        _
      %p573 = scmp.le.s32.totalorder 2, %s19
      // Predicated region
      $region61: #{tpu_custom_call.1} parent=5 // pred_check
        %p574 = pneg %p573
      $region62: #{tpu_custom_call.1} parent=5 // pred_check_branch
        %576 = sbr.rel (%p574) target = $region64
      $region63: #{tpu_custom_call.1} parent=5 // pred_region
        %s577 = ssub.s32 %s19, 2
        // Predicated region
        $region65: #{tpu_custom_call.1} parent=63 // pred_check
          %p578 = pneg %p181
        $region66: #{tpu_custom_call.1} parent=63 // pred_check_branch
          %580 = sbr.rel (%p578) target = $region68
        $region67: #{tpu_custom_call.1} parent=63 // pred_region
          %s581 = sand.u32 %s166, 1
          %s582 = scalar_lea.sflag [#allocation7], %s581
          %s583 = sand.u32 %s166, 1
          %s584 = smul.addr %s583, 8
          %s585 = scalar_lea.vmem [#allocation11], %s584
          %586 = dma.done %s582, 128
        $region68: #{tpu_custom_call.1} parent=63 // pred_fallthru
          _
      $region64: #{tpu_custom_call.1} parent=5 // pred_fallthru
        _
    $region6: #{tpu_custom_call.1} parent=1 // loop_footer
      %s23 = sadd.s32 1, %s19
    $region7: #{tpu_custom_call.1} parent=1 // loop_footer_branch
      %18 = sbr.rel target = $region3
    $region8: #{tpu_custom_call.1} parent=1 // loop_exit
      _
    %587 = vsyncpa [#allocation6], 1
    %s588 = scalar_lea.sflag [#allocation6], 1
    %589 = vsyncpa %s588, 1
    %590 = vsyncpa [#allocation9], 1
    %s591 = scalar_lea.sflag [#allocation9], 1
    %592 = vsyncpa %s591, 1
    %593 = vsyncpa [#allocation7], 1
    %s594 = scalar_lea.sflag [#allocation7], 1
    %595 = vsyncpa %s594, 1

</llo_original>
